<compile_context>
chip_gen: v7x
topology: tpu7x:2x2x1
jax: 0.10.0
libtpu: 0.0.40
codegen_flags: <defaults>
</compile_context>

<pallas_src>
import math

import jax
import jax.numpy as jnp
from jax import lax
from jax.experimental import pallas as pl
from jax.experimental.pallas import tpu as pltpu

_LN_EPS = 1e-5  # nn.LayerNorm default


def _patch_merging_kernel(x_ref, wev_ref, wod_ref, bias_ref, o_ref):
    """Fused 2x2 gather + LayerNorm(4C) + Linear(4C->2C) on one row tile.

    x_ref:    (tr, 2, W2, 2C)  row-pair tile; dim 1 = even/odd image row,
                               last dim packs [col-even | col-odd] features.
    wev_ref:  (2C, 2C)         gamma-folded weight rows for the even-row slab ([x0|x2])
    wod_ref:  (2C, 2C)         gamma-folded weight rows for the odd-row slab  ([x1|x3])
    bias_ref: (1, 2C)          beta @ W_red^T (f32)
    o_ref:    (tr*W2, 2C)
    """
    tr, _, w2, two_c = x_ref.shape
    n = tr * w2

    # Slice the even/odd-row slabs out of the single DMA'd block and flatten
    # the (tr, W2) token dims.  The reshape is free when W2 is a multiple of
    # the sublane tile (true for the demo); for Swin resolutions where
    # W2 in {7, 14, 28} it is one in-VMEM relayout per slab, done on the raw
    # input dtype (smallest representation) — still far cheaper than an HBM
    # round-trip of the gathered tensor.
    ev = x_ref[:, 0, :, :].reshape(n, two_c).astype(jnp.float32)
    od = x_ref[:, 1, :, :].reshape(n, two_c).astype(jnp.float32)

    # LayerNorm statistics over the full 4C features (split across the 2
    # slabs), one-pass variance in f32 clamped at 0.
    # NOTE: on a ragged last grid step the padding rows hold garbage, so this
    # may transiently produce non-finite values there; those rows are dropped
    # by the masked output store.
    inv_4c = 1.0 / (2 * two_c)
    mean = (jnp.sum(ev, axis=-1, keepdims=True)
            + jnp.sum(od, axis=-1, keepdims=True)) * inv_4c
    mean_sq = (jnp.sum(ev * ev, axis=-1, keepdims=True)
               + jnp.sum(od * od, axis=-1, keepdims=True)) * inv_4c
    var = jnp.maximum(mean_sq - mean * mean, 0.0)
    inv_std = lax.rsqrt(var + _LN_EPS)

    # Cast the matmul LHS to the weight dtype (bf16 weights -> bf16 MXU path,
    # f32 accumulate).  Gamma/beta are already folded into wev/wod/bias.
    wdt = wev_ref.dtype
    nev = ((ev - mean) * inv_std).astype(wdt)
    nod = ((od - mean) * inv_std).astype(wdt)

    y = jnp.dot(nev, wev_ref[...], preferred_element_type=jnp.float32)
    y = y + jnp.dot(nod, wod_ref[...], preferred_element_type=jnp.float32)
    y = y + bias_ref[...].astype(jnp.float32)
    o_ref[...] = y.astype(o_ref.dtype)


def _vmem_capacity_bytes():
    """Physical VMEM per core; conservative (v7x-sized) fallback if unknown."""
    try:
        info = pltpu.get_tpu_info()
        for attr in ("vmem_capacity_bytes", "vmem_size_bytes", "vmem_bytes"):
            cap = getattr(info, attr, None)
            if cap:
                return int(cap)
    except Exception:
        pass
    return 64 * 1024 * 1024


def _plan_tiles(R, W2, C, x_itemsize, w_itemsize, out_itemsize):
    """Choose rows of the R = B*H//2 axis per grid step + the VMEM limit.

    The per-tile byte count includes the double-buffered pipelined blocks, the
    live in-kernel f32 temporaries, and subtracts the resident weights from
    the budget, so the chosen tile actually fits the generation's VMEM.
    """
    C2 = 2 * C
    vmem_cap = _vmem_capacity_bytes()
    vmem_limit = (vmem_cap * 3) // 4                 # headroom for compiler scratch

    # Resident (non-pipelined) operands: w_ev, w_od (weight dtype) + f32 bias.
    resident = 2 * C2 * C2 * w_itemsize + C2 * 4

    # Per R-row (= W2 output tokens):
    #   double-buffered input block  : 2 * (2*W2*2C) * x_itemsize
    #   double-buffered output block : 2 * (W2*2C)   * out_itemsize
    #   live in-kernel temporaries   : ev/od f32 upcasts, nev/nod (weight
    #                                  dtype), f32 accumulator y
    per_row = (2 * (2 * W2 * C2) * x_itemsize
               + 2 * (W2 * C2) * out_itemsize
               + W2 * C2 * (2 * 4 + 2 * w_itemsize + 4))

    budget = vmem_limit - resident - 2 * 1024 * 1024   # misc/internal margin
    tr = max(1, budget // per_row)

    # Keep the flattened output block (tr*W2, 2C) sublane-aligned (mult. of 8).
    step = 8 // math.gcd(W2, 8)
    tr = max(step, (tr // step) * step)
    tr = int(min(tr, R))   # tr == R makes the output block the full dim -> OK

    # Megacore balance: when the problem is large enough, cap the tile so the
    # ("parallel",) grid axis has at least MIN_STEPS steps to split across
    # TensorCores, without shrinking a step below ~1024 output tokens.
    MIN_STEPS = 8
    cap_tr = ((R // MIN_STEPS) // step) * step
    if cap_tr >= step and cap_tr * W2 >= 1024:
        tr = min(tr, cap_tr)

    return int(tr), int(vmem_limit)


def patch_merging(x, input_resolution, w_red_t, gamma, beta, weight_dtype=None):
    """Forward pass of PatchMerging.

    x:       (B, L, C) with L = H*W
    w_red_t: (4C, 2C)  -- transpose of nn.Linear(4C, 2C).weight
    gamma:   (4C,)     -- LayerNorm weight
    beta:    (4C,)     -- LayerNorm bias
    weight_dtype: optional dtype for the MXU reduction weights (e.g. bf16 on
                  v5e when reduced precision is acceptable).
    returns: (B, (H//2)*(W//2), 2C)
    """
    H, W = input_resolution
    B, L, C = x.shape
    assert L == H * W, "input feature has wrong size"
    assert H % 2 == 0 and W % 2 == 0, f"x size ({H}*{W}) are not even."
    H2, W2 = H // 2, W // 2
    R = B * H2              # even/odd image-row pairs
    M = R * W2              # output tokens
    C2 = 2 * C
    wdt = jnp.dtype(weight_dtype) if weight_dtype is not None else w_red_t.dtype

    # Free reshape: (B, H, W, C) -> (R, 2, W2, 2C). No data movement; dim 1
    # selects even/odd image rows, last dim packs [col-even | col-odd] feats.
    x4 = x.reshape(R, 2, W2, C2)

    # Fold LayerNorm affine into the reduction weight / bias, and split the
    # (4C, 2C) weight into the row groups matching the in-kernel feature order:
    #   even-row slab features = [x0 | x2]  -> original rows [0:C] ++ [2C:3C]
    #   odd-row  slab features = [x1 | x3]  -> original rows [C:2C] ++ [3C:4C]
    w_f32 = w_red_t.astype(jnp.float32)
    w_eff = gamma.astype(jnp.float32)[:, None] * w_f32                  # (4C, 2C)
    w_ev = jnp.concatenate([w_eff[:C], w_eff[2 * C:3 * C]], axis=0).astype(wdt)
    w_od = jnp.concatenate([w_eff[C:2 * C], w_eff[3 * C:]], axis=0).astype(wdt)
    bias = (beta.astype(jnp.float32) @ w_f32).reshape(1, C2)            # (1, 2C)

    tr, vmem_limit = _plan_tiles(R, W2, C, x.dtype.itemsize,
                                 jnp.dtype(wdt).itemsize, x.dtype.itemsize)
    grid = (pl.cdiv(R, tr),)

    # Fully-resident (non-pipelined) VMEM operands: loaded once.
    resident = pl.BlockSpec(memory_space=pltpu.MemorySpace.VMEM)

    # NOTE: with small C (demo 2C=64) output stores are lane-masked; real Swin
    # dims (2C >= 192) are lane-dense.  Do not tune on the demo shape.
    out2d = pl.pallas_call(
        _patch_merging_kernel,
        out_shape=jax.ShapeDtypeStruct((M, C2), x.dtype),
        grid_spec=pltpu.PrefetchScalarGridSpec(
            num_scalar_prefetch=0,
            grid=grid,
            in_specs=[
                # One contiguous HBM block per grid step (even+odd rows together).
                pl.BlockSpec((tr, 2, W2, C2), lambda i: (i, 0, 0, 0)),
                resident,   # w_ev
                resident,   # w_od
                resident,   # bias
            ],
            out_specs=pl.BlockSpec((tr * W2, C2), lambda i: (i, 0)),
        ),
        compiler_params=pltpu.CompilerParams(
            dimension_semantics=("parallel",),
            vmem_limit_bytes=vmem_limit,
        ),
    )(x4, w_ev, w_od, bias)

    return out2d.reshape(B, H2 * W2, C2)


def _reference(x, input_resolution, w_red_t, gamma, beta):
    """Pure-JAX reference mirroring the PyTorch forward."""
    H, W = input_resolution
    B, L, C = x.shape
    xg = x.reshape(B, H, W, C)
    x0 = xg[:, 0::2, 0::2, :]
    x1 = xg[:, 1::2, 0::2, :]
    x2 = xg[:, 0::2, 1::2, :]
    x3 = xg[:, 1::2, 1::2, :]
    xc = jnp.concatenate([x0, x1, x2, x3], axis=-1).reshape(B, -1, 4 * C)
    xf = xc.astype(jnp.float32)
    mean = jnp.mean(xf, axis=-1, keepdims=True)
    var = jnp.mean(jnp.square(xf - mean), axis=-1, keepdims=True)
    xn = (xf - mean) / jnp.sqrt(var + _LN_EPS)
    xn = xn * gamma.astype(jnp.float32) + beta.astype(jnp.float32)
    y = jnp.dot(xn, w_red_t.astype(jnp.float32),
                precision=jax.lax.Precision.HIGHEST)
    return y.astype(x.dtype)


if __name__ == "__main__":
    # Small shapes consistent with the module: B=2, H=W=16, dim=C=32.
    B, H, W, C = 2, 16, 16, 32
    key = jax.random.PRNGKey(0)
    kx, kw, kg, kb = jax.random.split(key, 4)

    x = jax.random.normal(kx, (B, H * W, C), dtype=jnp.float32)

    # Deterministic synthetic parameters (shapes from __init__):
    #   reduction: nn.Linear(4*dim, 2*dim, bias=False) -> weight (2C, 4C);
    #              we pass its transpose (4C, 2C).
    #   norm: nn.LayerNorm(4*dim) -> non-trivial gamma/beta to exercise folding.
    w_red = 0.02 * jax.random.normal(kw, (2 * C, 4 * C), dtype=jnp.float32)
    w_red_t = w_red.T
    gamma = 1.0 + 0.1 * jax.random.normal(kg, (4 * C,), dtype=jnp.float32)
    beta = 0.1 * jax.random.normal(kb, (4 * C,), dtype=jnp.float32)

    out = patch_merging(x, (H, W), w_red_t, gamma, beta)
    out = jax.block_until_ready(out)

    ref = _reference(x, (H, W), w_red_t, gamma, beta)
    assert out.shape == (B, (H // 2) * (W // 2), 2 * C), out.shape
    # Tolerance covers the TPU MXU's reduced-precision default f32 passes on
    # either side of the comparison.
    err = float(jnp.max(jnp.abs(out.astype(jnp.float32) - ref.astype(jnp.float32))))
    assert err < 2e-3, err
    print("KERNEL_OK")
</pallas_src>

<mosaic_0001>
module attributes {stable_mosaic.version = 11 : i64} {
  func.func @_patch_merging_kernel(%arg0: i32, %arg1: memref<16x2x8x64xf32, #tpu.memory_space<vmem>>, %arg2: memref<64x64xf32, #tpu.memory_space<vmem>>, %arg3: memref<64x64xf32, #tpu.memory_space<vmem>>, %arg4: memref<1x64xf32, #tpu.memory_space<vmem>>, %arg5: memref<128x64xf32, #tpu.memory_space<vmem>>) attributes {dimension_semantics = [#tpu.dimension_semantics<parallel>], iteration_bounds = array<i64: 1>, scalar_prefetch = 0 : i64, scratch_operands = 0 : i64, tpu.core_type = #tpu.core_type<tc>, window_params = [{transform_indices = @transform_0, window_bounds = array<i64: 16, 2, 8, 64>}, {pipeline_mode = #tpu.pipeline_mode<synchronous>, transform_indices = @transform_1, window_bounds = array<i64: 64, 64>}, {pipeline_mode = #tpu.pipeline_mode<synchronous>, transform_indices = @transform_2, window_bounds = array<i64: 64, 64>}, {pipeline_mode = #tpu.pipeline_mode<synchronous>, transform_indices = @transform_3, window_bounds = array<i64: 1, 64>}, {transform_indices = @transform_4, window_bounds = array<i64: 128, 64>}]} {
    %c0 = arith.constant 0 : index
    %c0_0 = arith.constant 0 : index
    %c0_1 = arith.constant 0 : index
    %c0_2 = arith.constant 0 : index
    %0 = vector.load %arg1[%c0, %c0_0, %c0_1, %c0_2] : memref<16x2x8x64xf32, #tpu.memory_space<vmem>>, vector<16x1x8x64xf32>
    %1 = vector.shape_cast %0 : vector<16x1x8x64xf32> to vector<16x8x64xf32>
    %2 = vector.shape_cast %1 : vector<16x8x64xf32> to vector<128x64xf32>
    %c0_3 = arith.constant 0 : index
    %c1 = arith.constant 1 : index
    %c0_4 = arith.constant 0 : index
    %c0_5 = arith.constant 0 : index
    %3 = vector.load %arg1[%c0_3, %c1, %c0_4, %c0_5] : memref<16x2x8x64xf32, #tpu.memory_space<vmem>>, vector<16x1x8x64xf32>
    %4 = vector.shape_cast %3 : vector<16x1x8x64xf32> to vector<16x8x64xf32>
    %5 = vector.shape_cast %4 : vector<16x8x64xf32> to vector<128x64xf32>
    %cst = arith.constant dense<0.000000e+00> : vector<128xf32>
    %6 = vector.multi_reduction <add>, %2, %cst [1] : vector<128x64xf32> to vector<128xf32>
    %7 = vector.shape_cast %6 : vector<128xf32> to vector<128x1xf32>
    %cst_6 = arith.constant dense<0.000000e+00> : vector<128xf32>
    %8 = vector.multi_reduction <add>, %5, %cst_6 [1] : vector<128x64xf32> to vector<128xf32>
    %9 = vector.shape_cast %8 : vector<128xf32> to vector<128x1xf32>
    %10 = arith.addf %7, %9 : vector<128x1xf32>
    %cst_7 = arith.constant 7.812500e-03 : f32
    %11 = vector.broadcast %cst_7 : f32 to vector<128x1xf32>
    %12 = arith.mulf %10, %11 : vector<128x1xf32>
    %13 = arith.mulf %2, %2 : vector<128x64xf32>
    %cst_8 = arith.constant dense<0.000000e+00> : vector<128xf32>
    %14 = vector.multi_reduction <add>, %13, %cst_8 [1] : vector<128x64xf32> to vector<128xf32>
    %15 = vector.shape_cast %14 : vector<128xf32> to vector<128x1xf32>
    %16 = arith.mulf %5, %5 : vector<128x64xf32>
    %cst_9 = arith.constant dense<0.000000e+00> : vector<128xf32>
    %17 = vector.multi_reduction <add>, %16, %cst_9 [1] : vector<128x64xf32> to vector<128xf32>
    %18 = vector.shape_cast %17 : vector<128xf32> to vector<128x1xf32>
    %19 = arith.addf %15, %18 : vector<128x1xf32>
    %cst_10 = arith.constant 7.812500e-03 : f32
    %20 = vector.broadcast %cst_10 : f32 to vector<128x1xf32>
    %21 = arith.mulf %19, %20 : vector<128x1xf32>
    %22 = arith.mulf %12, %12 : vector<128x1xf32>
    %23 = arith.subf %21, %22 : vector<128x1xf32>
    %cst_11 = arith.constant 0.000000e+00 : f32
    %24 = vector.broadcast %cst_11 : f32 to vector<128x1xf32>
    %25 = arith.maximumf %23, %24 : vector<128x1xf32>
    %cst_12 = arith.constant 9.99999974E-6 : f32
    %26 = vector.broadcast %cst_12 : f32 to vector<128x1xf32>
    %27 = arith.addf %25, %26 : vector<128x1xf32>
    %28 = math.rsqrt %27 : vector<128x1xf32>
    %29 = vector.broadcast %12 : vector<128x1xf32> to vector<128x64xf32>
    %30 = arith.subf %2, %29 : vector<128x64xf32>
    %31 = vector.broadcast %28 : vector<128x1xf32> to vector<128x64xf32>
    %32 = arith.mulf %30, %31 : vector<128x64xf32>
    %33 = vector.broadcast %12 : vector<128x1xf32> to vector<128x64xf32>
    %34 = arith.subf %5, %33 : vector<128x64xf32>
    %35 = vector.broadcast %28 : vector<128x1xf32> to vector<128x64xf32>
    %36 = arith.mulf %34, %35 : vector<128x64xf32>
    %c0_13 = arith.constant 0 : index
    %c0_14 = arith.constant 0 : index
    %37 = vector.load %arg2[%c0_13, %c0_14] : memref<64x64xf32, #tpu.memory_space<vmem>>, vector<64x64xf32>
    %cst_15 = arith.constant dense<0.000000e+00> : vector<128x64xf32>
    %38 = tpu.matmul %32, %37, %cst_15 {dimension_numbers = #tpu.dot_dimension_numbers<[1], [0], [0], [1], [0, 0, 1, 1], [], []>} : vector<128x64xf32>, vector<64x64xf32>, vector<128x64xf32> -> vector<128x64xf32>
    %c0_16 = arith.constant 0 : index
    %c0_17 = arith.constant 0 : index
    %39 = vector.load %arg3[%c0_16, %c0_17] : memref<64x64xf32, #tpu.memory_space<vmem>>, vector<64x64xf32>
    %cst_18 = arith.constant dense<0.000000e+00> : vector<128x64xf32>
    %40 = tpu.matmul %36, %39, %cst_18 {dimension_numbers = #tpu.dot_dimension_numbers<[1], [0], [0], [1], [0, 0, 1, 1], [], []>} : vector<128x64xf32>, vector<64x64xf32>, vector<128x64xf32> -> vector<128x64xf32>
    %41 = arith.addf %38, %40 : vector<128x64xf32>
    %c0_19 = arith.constant 0 : index
    %c0_20 = arith.constant 0 : index
    %42 = vector.load %arg4[%c0_19, %c0_20] : memref<1x64xf32, #tpu.memory_space<vmem>>, vector<1x64xf32>
    %43 = vector.broadcast %42 : vector<1x64xf32> to vector<128x64xf32>
    %44 = arith.addf %41, %43 : vector<128x64xf32>
    %c0_21 = arith.constant 0 : index
    %c0_22 = arith.constant 0 : index
    %45 = vector.load %arg5[%c0_21, %c0_22] : memref<128x64xf32, #tpu.memory_space<vmem>>, vector<128x64xf32>
    tpu.vector_store %arg5[%c0_21, %c0_22], %44 {strides = array<i32>} : memref<128x64xf32, #tpu.memory_space<vmem>>, vector<128x64xf32>,
    return
  }
  func.func @transform_0(%arg0: i32) -> (i32, i32, i32, i32) {
    %c0_i32 = arith.constant 0 : i32
    %c0_i32_0 = arith.constant 0 : i32
    %c0_i32_1 = arith.constant 0 : i32
    %c0_i32_2 = arith.constant 0 : i32
    return %arg0, %c0_i32, %c0_i32_0, %c0_i32_1 : i32, i32, i32, i32
  }
  func.func @transform_1(%arg0: i32) -> (i32, i32) {
    %c0_i32 = arith.constant 0 : i32
    %c0_i32_0 = arith.constant 0 : i32
    %c0_i32_1 = arith.constant 0 : i32
    return %c0_i32, %c0_i32_0 : i32, i32
  }
  func.func @transform_2(%arg0: i32) -> (i32, i32) {
    %c0_i32 = arith.constant 0 : i32
    %c0_i32_0 = arith.constant 0 : i32
    %c0_i32_1 = arith.constant 0 : i32
    return %c0_i32, %c0_i32_0 : i32, i32
  }
  func.func @transform_3(%arg0: i32) -> (i32, i32) {
    %c0_i32 = arith.constant 0 : i32
    %c0_i32_0 = arith.constant 0 : i32
    %c0_i32_1 = arith.constant 0 : i32
    return %c0_i32, %c0_i32_0 : i32, i32
  }
  func.func @transform_4(%arg0: i32) -> (i32, i32) {
    %c0_i32 = arith.constant 0 : i32
    %c0_i32_0 = arith.constant 0 : i32
    return %arg0, %c0_i32 : i32, i32
  }
}

</mosaic_0001>

<llo_original>
// kernel: tpu_custom_call.1
$region0: #{tpu_custom_call.1}
  #allocation0 [shape = 'u32[]', space=smem, size = 0x4, offset = 0x4, fixed_abs, tag = 'smem constant byte address 0x4 - core index']
  #allocation1 [shape = 'u32[144,128]{1,0:T(1,128)}', space=vmem, size = 0x12000, scoped, tag = 'internal scratch']
  %s0 = inlined_call_operand.hbm [shape: f32[16,2,8,64], index: 0, kind: input, shape index: {}]
  %s1 = inlined_call_operand.hbm [shape: f32[64,64], index: 1, kind: input, shape index: {}]
  %s2 = inlined_call_operand.hbm [shape: f32[64,64], index: 2, kind: input, shape index: {}]
  %s3 = inlined_call_operand.vmem [shape: f32[1,64], index: 3, kind: input, shape index: {}]
  %s4 = inlined_call_operand.vmem [shape: f32[128,64], index: 4, kind: output, shape index: {}]
  %s5 = sld [smem:[#allocation0]]
  $region38: #{tpu_custom_call.1} parent=0
    _
  %s7 = ssub.s32 1, %s5
  %s8 = scalar_select 0, %s7, %s5
  $region1: #{tpu_custom_call.1} parent=0
    #allocation2 [shape = 'u8[131072]{0}', space=vmem, size = 0x20000, scoped, tag = 'input window, operand 0, single buffered']
    #allocation3 [shape = 's32[1]{0}', space=sflag, size = 0x4, scoped, tag = 'scoped memory for tpu_custom_call.1']
    #allocation4 [shape = 'u8[32768]{0}', space=vmem, size = 0x8000, scoped, tag = 'input window, operand 1, single buffered']
    #allocation5 [shape = 's32[1]{0}', space=sflag, size = 0x4, scoped, tag = 'scoped memory for tpu_custom_call.1']
    #allocation6 [shape = 'u8[32768]{0}', space=vmem, size = 0x8000, scoped, tag = 'input window, operand 2, single buffered']
    %9 = vsyncpa [#allocation3], 0
    %10 = vsyncpa [#allocation5], 0
    // Predicated region
    $region2: #{tpu_custom_call.1} parent=1 // pred_check
      _
    $region3: #{tpu_custom_call.1} parent=1 // pred_check_branch
      %12 = sbr.rel (0) target = $region5
    $region4: #{tpu_custom_call.1} parent=1 // pred_region
      %s14 = ssub.s32 4096, 4096
      %15 = vsyncadd [#allocation3], %s14
      %s16 = sshll.u32 [#allocation2], 4
      %s17 = int_to_ptr.vmem [resolvable:$true] %s16
      %22 = dma.hbm_to_vmem [thread:$0]  %s0, 4096, %s17, [#allocation3], 128, 128, 8
    $region5: #{tpu_custom_call.1} parent=1 // pred_fallthru
      _
    // Predicated region
    $region6: #{tpu_custom_call.1} parent=1 // pred_check
      _
    $region7: #{tpu_custom_call.1} parent=1 // pred_check_branch
      %24 = sbr.rel (0) target = $region9
    $region8: #{tpu_custom_call.1} parent=1 // pred_region
      %s26 = ssub.s32 1024, 1024
      %27 = vsyncadd [#allocation5], %s26
      %s28 = sshll.u32 [#allocation4], 4
      %s29 = int_to_ptr.vmem [resolvable:$true] %s28
      %34 = dma.hbm_to_vmem [thread:$0]  %s1, 1024, %s29, [#allocation5], 128, 128, 8
    $region9: #{tpu_custom_call.1} parent=1 // pred_fallthru
      _
    // Predicated region
    $region10: #{tpu_custom_call.1} parent=1 // pred_check
      _
    $region11: #{tpu_custom_call.1} parent=1 // pred_check_branch
      %36 = sbr.rel (0) target = $region13
    $region12: #{tpu_custom_call.1} parent=1 // pred_region
      %s38 = ssub.s32 1024, 1024
      %39 = vsyncadd [#allocation5], %s38
      %s40 = sshll.u32 [#allocation6], 4
      %s41 = int_to_ptr.vmem [resolvable:$true] %s40
      %46 = dma.hbm_to_vmem [thread:$0]  %s2, 1024, %s41, [#allocation5], 128, 128, 8
    $region13: #{tpu_custom_call.1} parent=1 // pred_fallthru
      _
    // Predicated region
    $region14: #{tpu_custom_call.1} parent=1 // pred_check
      _
    $region15: #{tpu_custom_call.1} parent=1 // pred_check_branch
      %48 = sbr.rel (0) target = $region17
    $region16: #{tpu_custom_call.1} parent=1 // pred_region
      _
    $region17: #{tpu_custom_call.1} parent=1 // pred_fallthru
      _
    // Predicated region
    $region18: #{tpu_custom_call.1} parent=1 // pred_check
      _
    $region19: #{tpu_custom_call.1} parent=1 // pred_check_branch
      %50 = sbr.rel (0) target = $region21
    $region20: #{tpu_custom_call.1} parent=1 // pred_region
      %51 = dma.done [#allocation3], 4096
    $region21: #{tpu_custom_call.1} parent=1 // pred_fallthru
      _
    // Predicated region
    $region22: #{tpu_custom_call.1} parent=1 // pred_check
      _
    $region23: #{tpu_custom_call.1} parent=1 // pred_check_branch
      %53 = sbr.rel (0) target = $region25
    $region24: #{tpu_custom_call.1} parent=1 // pred_region
      %54 = dma.done [#allocation5], 1024
    $region25: #{tpu_custom_call.1} parent=1 // pred_fallthru
      _
    // Predicated region
    $region26: #{tpu_custom_call.1} parent=1 // pred_check
      _
    $region27: #{tpu_custom_call.1} parent=1 // pred_check_branch
      %56 = sbr.rel (0) target = $region29
    $region28: #{tpu_custom_call.1} parent=1 // pred_region
      %57 = dma.done [#allocation5], 1024
    $region29: #{tpu_custom_call.1} parent=1 // pred_fallthru
      _
    %v58 = vld [vmem:[#allocation2] sm:$0xff]
    %v59 = vld [vmem:[#allocation2 + $0x10] sm:$0xff]
    %v60 = vld [vmem:[#allocation2 + $0x20] sm:$0xff]
    %v61 = vld [vmem:[#allocation2 + $0x30] sm:$0xff]
    %v62 = vld [vmem:[#allocation2 + $0x40] sm:$0xff]
    %v63 = vld [vmem:[#allocation2 + $0x50] sm:$0xff]
    %v64 = vld [vmem:[#allocation2 + $0x60] sm:$0xff]
    %v65 = vld [vmem:[#allocation2 + $0x70] sm:$0xff]
    %v66 = vld [vmem:[#allocation2 + $0x80] sm:$0xff]
    %v67 = vld [vmem:[#allocation2 + $0x90] sm:$0xff]
    %v68 = vld [vmem:[#allocation2 + $0xa0] sm:$0xff]
    %v69 = vld [vmem:[#allocation2 + $0xb0] sm:$0xff]
    %v70 = vld [vmem:[#allocation2 + $0xc0] sm:$0xff]
    %v71 = vld [vmem:[#allocation2 + $0xd0] sm:$0xff]
    %v72 = vld [vmem:[#allocation2 + $0xe0] sm:$0xff]
    %v73 = vld [vmem:[#allocation2 + $0xf0] sm:$0xff]
    %s74 = scalar_lea.vmem [#allocation2], 8
    %v75 = vld [vmem:[%s74] sm:$0xff]
    %v76 = vld [vmem:[%s74 + $0x10] sm:$0xff]
    %v77 = vld [vmem:[%s74 + $0x20] sm:$0xff]
    %v78 = vld [vmem:[%s74 + $0x30] sm:$0xff]
    %v79 = vld [vmem:[%s74 + $0x40] sm:$0xff]
    %v80 = vld [vmem:[%s74 + $0x50] sm:$0xff]
    %v81 = vld [vmem:[%s74 + $0x60] sm:$0xff]
    %v82 = vld [vmem:[%s74 + $0x70] sm:$0xff]
    %v83 = vld [vmem:[%s74 + $0x80] sm:$0xff]
    %v84 = vld [vmem:[%s74 + $0x90] sm:$0xff]
    %v85 = vld [vmem:[%s74 + $0xa0] sm:$0xff]
    %v86 = vld [vmem:[%s74 + $0xb0] sm:$0xff]
    %v87 = vld [vmem:[%s74 + $0xc0] sm:$0xff]
    %v88 = vld [vmem:[%s74 + $0xd0] sm:$0xff]
    %v89 = vld [vmem:[%s74 + $0xe0] sm:$0xff]
    %v90 = vld [vmem:[%s74 + $0xf0] sm:$0xff]
    %vm91 = vcmask 523264
    %v92 = vsel %vm91, %v58, 0.0
    %93 = vadd.xlane.f32.xlu0 %v92
    %v94 = vpop.xlane.xlu0 %93
    %v95 = vsel %vm91, %v59, 0.0
    %96 = vadd.xlane.f32.xlu0 %v95
    %v97 = vpop.xlane.xlu0 %96
    %v98 = vsel %vm91, %v60, 0.0
    %99 = vadd.xlane.f32.xlu0 %v98
    %v100 = vpop.xlane.xlu0 %99
    %v101 = vsel %vm91, %v61, 0.0
    %102 = vadd.xlane.f32.xlu0 %v101
    %v103 = vpop.xlane.xlu0 %102
    %v104 = vsel %vm91, %v62, 0.0
    %105 = vadd.xlane.f32.xlu0 %v104
    %v106 = vpop.xlane.xlu0 %105
    %v107 = vsel %vm91, %v63, 0.0
    %108 = vadd.xlane.f32.xlu0 %v107
    %v109 = vpop.xlane.xlu0 %108
    %v110 = vsel %vm91, %v64, 0.0
    %111 = vadd.xlane.f32.xlu0 %v110
    %v112 = vpop.xlane.xlu0 %111
    %v113 = vsel %vm91, %v65, 0.0
    %114 = vadd.xlane.f32.xlu0 %v113
    %v115 = vpop.xlane.xlu0 %114
    %v116 = vsel %vm91, %v66, 0.0
    %117 = vadd.xlane.f32.xlu0 %v116
    %v118 = vpop.xlane.xlu0 %117
    %v119 = vsel %vm91, %v67, 0.0
    %120 = vadd.xlane.f32.xlu0 %v119
    %v121 = vpop.xlane.xlu0 %120
    %v122 = vsel %vm91, %v68, 0.0
    %123 = vadd.xlane.f32.xlu0 %v122
    %v124 = vpop.xlane.xlu0 %123
    %v125 = vsel %vm91, %v69, 0.0
    %126 = vadd.xlane.f32.xlu0 %v125
    %v127 = vpop.xlane.xlu0 %126
    %v128 = vsel %vm91, %v70, 0.0
    %129 = vadd.xlane.f32.xlu0 %v128
    %v130 = vpop.xlane.xlu0 %129
    %v131 = vsel %vm91, %v71, 0.0
    %132 = vadd.xlane.f32.xlu0 %v131
    %v133 = vpop.xlane.xlu0 %132
    %v134 = vsel %vm91, %v72, 0.0
    %135 = vadd.xlane.f32.xlu0 %v134
    %v136 = vpop.xlane.xlu0 %135
    %v137 = vsel %vm91, %v73, 0.0
    %138 = vadd.xlane.f32.xlu0 %v137
    %v139 = vpop.xlane.xlu0 %138
    %v140 = vsel %vm91, %v75, 0.0
    %141 = vadd.xlane.f32.xlu0 %v140
    %v142 = vpop.xlane.xlu0 %141
    %v143 = vsel %vm91, %v76, 0.0
    %144 = vadd.xlane.f32.xlu0 %v143
    %v145 = vpop.xlane.xlu0 %144
    %v146 = vsel %vm91, %v77, 0.0
    %147 = vadd.xlane.f32.xlu0 %v146
    %v148 = vpop.xlane.xlu0 %147
    %v149 = vsel %vm91, %v78, 0.0
    %150 = vadd.xlane.f32.xlu0 %v149
    %v151 = vpop.xlane.xlu0 %150
    %v152 = vsel %vm91, %v79, 0.0
    %153 = vadd.xlane.f32.xlu0 %v152
    %v154 = vpop.xlane.xlu0 %153
    %v155 = vsel %vm91, %v80, 0.0
    %156 = vadd.xlane.f32.xlu0 %v155
    %v157 = vpop.xlane.xlu0 %156
    %v158 = vsel %vm91, %v81, 0.0
    %159 = vadd.xlane.f32.xlu0 %v158
    %v160 = vpop.xlane.xlu0 %159
    %v161 = vsel %vm91, %v82, 0.0
    %162 = vadd.xlane.f32.xlu0 %v161
    %v163 = vpop.xlane.xlu0 %162
    %v164 = vsel %vm91, %v83, 0.0
    %165 = vadd.xlane.f32.xlu0 %v164
    %v166 = vpop.xlane.xlu0 %165
    %v167 = vsel %vm91, %v84, 0.0
    %168 = vadd.xlane.f32.xlu0 %v167
    %v169 = vpop.xlane.xlu0 %168
    %v170 = vsel %vm91, %v85, 0.0
    %171 = vadd.xlane.f32.xlu0 %v170
    %v172 = vpop.xlane.xlu0 %171
    %v173 = vsel %vm91, %v86, 0.0
    %174 = vadd.xlane.f32.xlu0 %v173
    %v175 = vpop.xlane.xlu0 %174
    %v176 = vsel %vm91, %v87, 0.0
    %177 = vadd.xlane.f32.xlu0 %v176
    %v178 = vpop.xlane.xlu0 %177
    %v179 = vsel %vm91, %v88, 0.0
    %180 = vadd.xlane.f32.xlu0 %v179
    %v181 = vpop.xlane.xlu0 %180
    %v182 = vsel %vm91, %v89, 0.0
    %183 = vadd.xlane.f32.xlu0 %v182
    %v184 = vpop.xlane.xlu0 %183
    %v185 = vsel %vm91, %v90, 0.0
    %186 = vadd.xlane.f32.xlu0 %v185
    %v187 = vpop.xlane.xlu0 %186
    %v188 = vadd.f32 %v94, %v142
    %v189 = vadd.f32 %v97, %v145
    %v190 = vadd.f32 %v100, %v148
    %v191 = vadd.f32 %v103, %v151
    %v192 = vadd.f32 %v106, %v154
    %v193 = vadd.f32 %v109, %v157
    %v194 = vadd.f32 %v112, %v160
    %v195 = vadd.f32 %v115, %v163
    %v196 = vadd.f32 %v118, %v166
    %v197 = vadd.f32 %v121, %v169
    %v198 = vadd.f32 %v124, %v172
    %v199 = vadd.f32 %v127, %v175
    %v200 = vadd.f32 %v130, %v178
    %v201 = vadd.f32 %v133, %v181
    %v202 = vadd.f32 %v136, %v184
    %v203 = vadd.f32 %v139, %v187
    %v204 = vmul.f32 %v188, 0.0078125
    %v205 = vmul.f32 %v189, 0.0078125
    %v206 = vmul.f32 %v190, 0.0078125
    %v207 = vmul.f32 %v191, 0.0078125
    %v208 = vmul.f32 %v192, 0.0078125
    %v209 = vmul.f32 %v193, 0.0078125
    %v210 = vmul.f32 %v194, 0.0078125
    %v211 = vmul.f32 %v195, 0.0078125
    %v212 = vmul.f32 %v196, 0.0078125
    %v213 = vmul.f32 %v197, 0.0078125
    %v214 = vmul.f32 %v198, 0.0078125
    %v215 = vmul.f32 %v199, 0.0078125
    %v216 = vmul.f32 %v200, 0.0078125
    %v217 = vmul.f32 %v201, 0.0078125
    %v218 = vmul.f32 %v202, 0.0078125
    %v219 = vmul.f32 %v203, 0.0078125
    %v220 = vmul.f32 %v58, %v58
    %v221 = vmul.f32 %v59, %v59
    %v222 = vmul.f32 %v60, %v60
    %v223 = vmul.f32 %v61, %v61
    %v224 = vmul.f32 %v62, %v62
    %v225 = vmul.f32 %v63, %v63
    %v226 = vmul.f32 %v64, %v64
    %v227 = vmul.f32 %v65, %v65
    %v228 = vmul.f32 %v66, %v66
    %v229 = vmul.f32 %v67, %v67
    %v230 = vmul.f32 %v68, %v68
    %v231 = vmul.f32 %v69, %v69
    %v232 = vmul.f32 %v70, %v70
    %v233 = vmul.f32 %v71, %v71
    %v234 = vmul.f32 %v72, %v72
    %v235 = vmul.f32 %v73, %v73
    %v236 = vsel %vm91, %v220, 0.0
    %237 = vadd.xlane.f32.xlu0 %v236
    %v238 = vpop.xlane.xlu0 %237
    %v239 = vsel %vm91, %v221, 0.0
    %240 = vadd.xlane.f32.xlu0 %v239
    %v241 = vpop.xlane.xlu0 %240
    %v242 = vsel %vm91, %v222, 0.0
    %243 = vadd.xlane.f32.xlu0 %v242
    %v244 = vpop.xlane.xlu0 %243
    %v245 = vsel %vm91, %v223, 0.0
    %246 = vadd.xlane.f32.xlu0 %v245
    %v247 = vpop.xlane.xlu0 %246
    %v248 = vsel %vm91, %v224, 0.0
    %249 = vadd.xlane.f32.xlu0 %v248
    %v250 = vpop.xlane.xlu0 %249
    %v251 = vsel %vm91, %v225, 0.0
    %252 = vadd.xlane.f32.xlu0 %v251
    %v253 = vpop.xlane.xlu0 %252
    %v254 = vsel %vm91, %v226, 0.0
    %255 = vadd.xlane.f32.xlu0 %v254
    %v256 = vpop.xlane.xlu0 %255
    %v257 = vsel %vm91, %v227, 0.0
    %258 = vadd.xlane.f32.xlu0 %v257
    %v259 = vpop.xlane.xlu0 %258
    %v260 = vsel %vm91, %v228, 0.0
    %261 = vadd.xlane.f32.xlu0 %v260
    %v262 = vpop.xlane.xlu0 %261
    %v263 = vsel %vm91, %v229, 0.0
    %264 = vadd.xlane.f32.xlu0 %v263
    %v265 = vpop.xlane.xlu0 %264
    %v266 = vsel %vm91, %v230, 0.0
    %267 = vadd.xlane.f32.xlu0 %v266
    %v268 = vpop.xlane.xlu0 %267
    %v269 = vsel %vm91, %v231, 0.0
    %270 = vadd.xlane.f32.xlu0 %v269
    %v271 = vpop.xlane.xlu0 %270
    %v272 = vsel %vm91, %v232, 0.0
    %273 = vadd.xlane.f32.xlu0 %v272
    %v274 = vpop.xlane.xlu0 %273
    %v275 = vsel %vm91, %v233, 0.0
    %276 = vadd.xlane.f32.xlu0 %v275
    %v277 = vpop.xlane.xlu0 %276
    %v278 = vsel %vm91, %v234, 0.0
    %279 = vadd.xlane.f32.xlu0 %v278
    %v280 = vpop.xlane.xlu0 %279
    %v281 = vsel %vm91, %v235, 0.0
    %282 = vadd.xlane.f32.xlu0 %v281
    %v283 = vpop.xlane.xlu0 %282
    %v284 = vmul.f32 %v75, %v75
    %v285 = vmul.f32 %v76, %v76
    %v286 = vmul.f32 %v77, %v77
    %v287 = vmul.f32 %v78, %v78
    %v288 = vmul.f32 %v79, %v79
    %v289 = vmul.f32 %v80, %v80
    %v290 = vmul.f32 %v81, %v81
    %v291 = vmul.f32 %v82, %v82
    %v292 = vmul.f32 %v83, %v83
    %v293 = vmul.f32 %v84, %v84
    %v294 = vmul.f32 %v85, %v85
    %v295 = vmul.f32 %v86, %v86
    %v296 = vmul.f32 %v87, %v87
    %v297 = vmul.f32 %v88, %v88
    %v298 = vmul.f32 %v89, %v89
    %v299 = vmul.f32 %v90, %v90
    %v300 = vsel %vm91, %v284, 0.0
    %301 = vadd.xlane.f32.xlu0 %v300
    %v302 = vpop.xlane.xlu0 %301
    %v303 = vsel %vm91, %v285, 0.0
    %304 = vadd.xlane.f32.xlu0 %v303
    %v305 = vpop.xlane.xlu0 %304
    %v306 = vsel %vm91, %v286, 0.0
    %307 = vadd.xlane.f32.xlu0 %v306
    %v308 = vpop.xlane.xlu0 %307
    %v309 = vsel %vm91, %v287, 0.0
    %310 = vadd.xlane.f32.xlu0 %v309
    %v311 = vpop.xlane.xlu0 %310
    %v312 = vsel %vm91, %v288, 0.0
    %313 = vadd.xlane.f32.xlu0 %v312
    %v314 = vpop.xlane.xlu0 %313
    %v315 = vsel %vm91, %v289, 0.0
    %316 = vadd.xlane.f32.xlu0 %v315
    %v317 = vpop.xlane.xlu0 %316
    %v318 = vsel %vm91, %v290, 0.0
    %319 = vadd.xlane.f32.xlu0 %v318
    %v320 = vpop.xlane.xlu0 %319
    %v321 = vsel %vm91, %v291, 0.0
    %322 = vadd.xlane.f32.xlu0 %v321
    %v323 = vpop.xlane.xlu0 %322
    %v324 = vsel %vm91, %v292, 0.0
    %325 = vadd.xlane.f32.xlu0 %v324
    %v326 = vpop.xlane.xlu0 %325
    %v327 = vsel %vm91, %v293, 0.0
    %328 = vadd.xlane.f32.xlu0 %v327
    %v329 = vpop.xlane.xlu0 %328
    %v330 = vsel %vm91, %v294, 0.0
    %331 = vadd.xlane.f32.xlu0 %v330
    %v332 = vpop.xlane.xlu0 %331
    %v333 = vsel %vm91, %v295, 0.0
    %334 = vadd.xlane.f32.xlu0 %v333
    %v335 = vpop.xlane.xlu0 %334
    %v336 = vsel %vm91, %v296, 0.0
    %337 = vadd.xlane.f32.xlu0 %v336
    %v338 = vpop.xlane.xlu0 %337
    %v339 = vsel %vm91, %v297, 0.0
    %340 = vadd.xlane.f32.xlu0 %v339
    %v341 = vpop.xlane.xlu0 %340
    %v342 = vsel %vm91, %v298, 0.0
    %343 = vadd.xlane.f32.xlu0 %v342
    %v344 = vpop.xlane.xlu0 %343
    %v345 = vsel %vm91, %v299, 0.0
    %346 = vadd.xlane.f32.xlu0 %v345
    %v347 = vpop.xlane.xlu0 %346
    %v348 = vadd.f32 %v238, %v302
    %v349 = vadd.f32 %v241, %v305
    %v350 = vadd.f32 %v244, %v308
    %v351 = vadd.f32 %v247, %v311
    %v352 = vadd.f32 %v250, %v314
    %v353 = vadd.f32 %v253, %v317
    %v354 = vadd.f32 %v256, %v320
    %v355 = vadd.f32 %v259, %v323
    %v356 = vadd.f32 %v262, %v326
    %v357 = vadd.f32 %v265, %v329
    %v358 = vadd.f32 %v268, %v332
    %v359 = vadd.f32 %v271, %v335
    %v360 = vadd.f32 %v274, %v338
    %v361 = vadd.f32 %v277, %v341
    %v362 = vadd.f32 %v280, %v344
    %v363 = vadd.f32 %v283, %v347
    %v364 = vmul.f32 %v348, 0.0078125
    %v365 = vmul.f32 %v349, 0.0078125
    %v366 = vmul.f32 %v350, 0.0078125
    %v367 = vmul.f32 %v351, 0.0078125
    %v368 = vmul.f32 %v352, 0.0078125
    %v369 = vmul.f32 %v353, 0.0078125
    %v370 = vmul.f32 %v354, 0.0078125
    %v371 = vmul.f32 %v355, 0.0078125
    %v372 = vmul.f32 %v356, 0.0078125
    %v373 = vmul.f32 %v357, 0.0078125
    %v374 = vmul.f32 %v358, 0.0078125
    %v375 = vmul.f32 %v359, 0.0078125
    %v376 = vmul.f32 %v360, 0.0078125
    %v377 = vmul.f32 %v361, 0.0078125
    %v378 = vmul.f32 %v362, 0.0078125
    %v379 = vmul.f32 %v363, 0.0078125
    %v380 = vmul.f32 %v204, %v204
    %v381 = vmul.f32 %v205, %v205
    %v382 = vmul.f32 %v206, %v206
    %v383 = vmul.f32 %v207, %v207
    %v384 = vmul.f32 %v208, %v208
    %v385 = vmul.f32 %v209, %v209
    %v386 = vmul.f32 %v210, %v210
    %v387 = vmul.f32 %v211, %v211
    %v388 = vmul.f32 %v212, %v212
    %v389 = vmul.f32 %v213, %v213
    %v390 = vmul.f32 %v214, %v214
    %v391 = vmul.f32 %v215, %v215
    %v392 = vmul.f32 %v216, %v216
    %v393 = vmul.f32 %v217, %v217
    %v394 = vmul.f32 %v218, %v218
    %v395 = vmul.f32 %v219, %v219
    %v396 = vsub.f32 %v364, %v380
    %v397 = vsub.f32 %v365, %v381
    %v398 = vsub.f32 %v366, %v382
    %v399 = vsub.f32 %v367, %v383
    %v400 = vsub.f32 %v368, %v384
    %v401 = vsub.f32 %v369, %v385
    %v402 = vsub.f32 %v370, %v386
    %v403 = vsub.f32 %v371, %v387
    %v404 = vsub.f32 %v372, %v388
    %v405 = vsub.f32 %v373, %v389
    %v406 = vsub.f32 %v374, %v390
    %v407 = vsub.f32 %v375, %v391
    %v408 = vsub.f32 %v376, %v392
    %v409 = vsub.f32 %v377, %v393
    %v410 = vsub.f32 %v378, %v394
    %v411 = vsub.f32 %v379, %v395
    %v412 = vmax.f32 %v396, 0.0
    %v413 = vmax.f32 %v397, 0.0
    %v414 = vmax.f32 %v398, 0.0
    %v415 = vmax.f32 %v399, 0.0
    %v416 = vmax.f32 %v400, 0.0
    %v417 = vmax.f32 %v401, 0.0
    %v418 = vmax.f32 %v402, 0.0
    %v419 = vmax.f32 %v403, 0.0
    %v420 = vmax.f32 %v404, 0.0
    %v421 = vmax.f32 %v405, 0.0
    %v422 = vmax.f32 %v406, 0.0
    %v423 = vmax.f32 %v407, 0.0
    %v424 = vmax.f32 %v408, 0.0
    %v425 = vmax.f32 %v409, 0.0
    %v426 = vmax.f32 %v410, 0.0
    %v427 = vmax.f32 %v411, 0.0
    %v428 = vadd.f32 %v412, 1e-05
    %v429 = vadd.f32 %v413, 1e-05
    %v430 = vadd.f32 %v414, 1e-05
    %v431 = vadd.f32 %v415, 1e-05
    %v432 = vadd.f32 %v416, 1e-05
    %v433 = vadd.f32 %v417, 1e-05
    %v434 = vadd.f32 %v418, 1e-05
    %v435 = vadd.f32 %v419, 1e-05
    %v436 = vadd.f32 %v420, 1e-05
    %v437 = vadd.f32 %v421, 1e-05
    %v438 = vadd.f32 %v422, 1e-05
    %v439 = vadd.f32 %v423, 1e-05
    %v440 = vadd.f32 %v424, 1e-05
    %v441 = vadd.f32 %v425, 1e-05
    %v442 = vadd.f32 %v426, 1e-05
    %v443 = vadd.f32 %v427, 1e-05
    %v444 = vrsqrt.pop %v428
    %v445 = vrsqrt.pop %v429
    %v446 = vrsqrt.pop %v430
    %v447 = vrsqrt.pop %v431
    %v448 = vrsqrt.pop %v432
    %v449 = vrsqrt.pop %v433
    %v450 = vrsqrt.pop %v434
    %v451 = vrsqrt.pop %v435
    %v452 = vrsqrt.pop %v436
    %v453 = vrsqrt.pop %v437
    %v454 = vrsqrt.pop %v438
    %v455 = vrsqrt.pop %v439
    %v456 = vrsqrt.pop %v440
    %v457 = vrsqrt.pop %v441
    %v458 = vrsqrt.pop %v442
    %v459 = vrsqrt.pop %v443
    %v460 = vsub.f32 %v58, %v204
    %v461 = vsub.f32 %v59, %v205
    %v462 = vsub.f32 %v60, %v206
    %v463 = vsub.f32 %v61, %v207
    %v464 = vsub.f32 %v62, %v208
    %v465 = vsub.f32 %v63, %v209
    %v466 = vsub.f32 %v64, %v210
    %v467 = vsub.f32 %v65, %v211
    %v468 = vsub.f32 %v66, %v212
    %v469 = vsub.f32 %v67, %v213
    %v470 = vsub.f32 %v68, %v214
    %v471 = vsub.f32 %v69, %v215
    %v472 = vsub.f32 %v70, %v216
    %v473 = vsub.f32 %v71, %v217
    %v474 = vsub.f32 %v72, %v218
    %v475 = vsub.f32 %v73, %v219
    %v476 = vmul.f32 %v460, %v444
    %v477 = vmul.f32 %v461, %v445
    %v478 = vmul.f32 %v462, %v446
    %v479 = vmul.f32 %v463, %v447
    %v480 = vmul.f32 %v464, %v448
    %v481 = vmul.f32 %v465, %v449
    %v482 = vmul.f32 %v466, %v450
    %v483 = vmul.f32 %v467, %v451
    %v484 = vmul.f32 %v468, %v452
    %v485 = vmul.f32 %v469, %v453
    %v486 = vmul.f32 %v470, %v454
    %v487 = vmul.f32 %v471, %v455
    %v488 = vmul.f32 %v472, %v456
    %v489 = vmul.f32 %v473, %v457
    %v490 = vmul.f32 %v474, %v458
    %v491 = vmul.f32 %v475, %v459
    %v492 = vsub.f32 %v75, %v204
    %v493 = vsub.f32 %v76, %v205
    %v494 = vsub.f32 %v77, %v206
    %v495 = vsub.f32 %v78, %v207
    %v496 = vsub.f32 %v79, %v208
    %v497 = vsub.f32 %v80, %v209
    %v498 = vsub.f32 %v81, %v210
    %v499 = vsub.f32 %v82, %v211
    %v500 = vsub.f32 %v83, %v212
    %v501 = vsub.f32 %v84, %v213
    %v502 = vsub.f32 %v85, %v214
    %v503 = vsub.f32 %v86, %v215
    %v504 = vsub.f32 %v87, %v216
    %v505 = vsub.f32 %v88, %v217
    %v506 = vsub.f32 %v89, %v218
    %v507 = vsub.f32 %v90, %v219
    %v508 = vmul.f32 %v492, %v444
    %v509 = vmul.f32 %v493, %v445
    %v510 = vmul.f32 %v494, %v446
    %v511 = vmul.f32 %v495, %v447
    %v512 = vmul.f32 %v496, %v448
    %v513 = vmul.f32 %v497, %v449
    %v514 = vmul.f32 %v498, %v450
    %v515 = vmul.f32 %v499, %v451
    %v516 = vmul.f32 %v500, %v452
    %v517 = vmul.f32 %v501, %v453
    %v518 = vmul.f32 %v502, %v454
    %v519 = vmul.f32 %v503, %v455
    %v520 = vmul.f32 %v504, %v456
    %v521 = vmul.f32 %v505, %v457
    %v522 = vmul.f32 %v506, %v458
    %v523 = vmul.f32 %v507, %v459
    %v524 = vld [vmem:[#allocation4] sm:$0xff]
    %v525 = vld [vmem:[#allocation4 + $0x8] sm:$0xff]
    %v526 = vld [vmem:[#allocation4 + $0x10] sm:$0xff]
    %v527 = vld [vmem:[#allocation4 + $0x18] sm:$0xff]
    %v528 = vld [vmem:[#allocation4 + $0x20] sm:$0xff]
    %v529 = vld [vmem:[#allocation4 + $0x28] sm:$0xff]
    %v530 = vld [vmem:[#allocation4 + $0x30] sm:$0xff]
    %v531 = vld [vmem:[#allocation4 + $0x38] sm:$0xff]
    %v532 = vld [vmem:[#allocation6] sm:$0xff]
    %v533 = vld [vmem:[#allocation6 + $0x8] sm:$0xff]
    %v534 = vld [vmem:[#allocation6 + $0x10] sm:$0xff]
    %v535 = vld [vmem:[#allocation6 + $0x18] sm:$0xff]
    %v536 = vld [vmem:[#allocation6 + $0x20] sm:$0xff]
    %v537 = vld [vmem:[#allocation6 + $0x28] sm:$0xff]
    %v538 = vld [vmem:[#allocation6 + $0x30] sm:$0xff]
    %v539 = vld [vmem:[#allocation6 + $0x38] sm:$0xff]
    %v541 = vsel %vm91, %v508, 0
    %v544 = vsel %vm91, %v509, 0
    %v547 = vsel %vm91, %v510, 0
    %v550 = vsel %vm91, %v511, 0
    %v553 = vsel %vm91, %v512, 0
    %v556 = vsel %vm91, %v513, 0
    %v559 = vsel %vm91, %v514, 0
    %v562 = vsel %vm91, %v515, 0
    %v565 = vsel %vm91, %v516, 0
    %v568 = vsel %vm91, %v517, 0
    %v571 = vsel %vm91, %v518, 0
    %v574 = vsel %vm91, %v519, 0
    %v577 = vsel %vm91, %v520, 0
    %v580 = vsel %vm91, %v521, 0
    %v583 = vsel %vm91, %v522, 0
    %v586 = vsel %vm91, %v523, 0
    %588 = vmatprep.subr.mxu0 0.0
    %589 = vmatpush1.msra.mxu0 %v532
    %590 = vmatprep.subr.mxu0 0.0
    %591 = vmatpush1.msra.mxu0 %v533
    %592 = vmatprep.subr.mxu0 0.0
    %593 = vmatpush1.msra.mxu0 %v534
    %594 = vmatprep.subr.mxu0 0.0
    %595 = vmatpush1.msra.mxu0 %v535
    %596 = vmatprep.subr.mxu0 0.0
    %597 = vmatpush1.msra.mxu0 %v536
    %598 = vmatprep.subr.mxu0 0.0
    %599 = vmatpush1.msra.mxu0 %v537
    %600 = vmatprep.subr.mxu0 0.0
    %601 = vmatpush1.msra.mxu0 %v538
    %602 = vmatprep.subr.mxu0 0.0
    %603 = vmatpush1.msra.mxu0 %v539
    %604 = vmatprep.subr.mxu0 0.0
    %605 = vmatpush1.msra.mxu0 0.0
    %606 = vmatprep.subr.mxu0 0.0
    %607 = vmatpush1.msra.mxu0 0.0
    %608 = vmatprep.subr.mxu0 0.0
    %609 = vmatpush1.msra.mxu0 0.0
    %610 = vmatprep.subr.mxu0 0.0
    %611 = vmatpush1.msra.mxu0 0.0
    %612 = vmatprep.subr.mxu0 0.0
    %613 = vmatpush1.msra.mxu0 0.0
    %614 = vmatprep.subr.mxu0 0.0
    %615 = vmatpush1.msra.mxu0 0.0
    %616 = vmatprep.subr.mxu0 0.0
    %617 = vmatpush1.msra.mxu0 0.0
    %618 = vmatprep.subr.mxu0 0.0
    %619 = vmatpush1.msra.mxu0 0.0
    %620 = vmatprep.subr.mxu0 0.0
    %621 = vmatpush1.msra.mxu0 0.0
    %622 = vmatprep.subr.mxu0 0.0
    %623 = vmatpush1.msra.mxu0 0.0
    %624 = vmatprep.subr.mxu0 0.0
    %625 = vmatpush1.msra.mxu0 0.0
    %626 = vmatprep.subr.mxu0 0.0
    %627 = vmatpush1.msra.mxu0 0.0
    %628 = vmatprep.subr.mxu0 0.0
    %629 = vmatpush1.msra.mxu0 0.0
    %630 = vmatprep.subr.mxu0 0.0
    %631 = vmatpush1.msra.mxu0 0.0
    %632 = vmatprep.subr.mxu0 0.0
    %633 = vmatpush1.msra.mxu0 0.0
    %634 = vmatprep.subr.mxu0 0.0
    %635 = vmatpush1.msra.mxu0 0.0
    %636 = vmatprep.subr.mxu0 0.0
    %637 = vmatpush1.msra.mxu0 0.0
    %638 = vmatprep.subr.mxu0 0.0
    %639 = vmatpush1.msra.mxu0 0.0
    %640 = vmatprep.subr.mxu0 0.0
    %641 = vmatpush1.msra.mxu0 0.0
    %642 = vmatprep.subr.mxu0 0.0
    %643 = vmatpush1.msra.mxu0 0.0
    %644 = vmatprep.subr.mxu0 0.0
    %645 = vmatpush1.msra.mxu0 0.0
    %646 = vmatprep.subr.mxu0 0.0
    %647 = vmatpush1.msra.mxu0 0.0
    %648 = vmatprep.subr.mxu0 0.0
    %649 = vmatpush1.msra.mxu0 0.0
    %650 = vmatprep.subr.mxu0 0.0
    %651 = vmatpush1.msra.mxu0 0.0
    %652 = vmatprep.mubr.f32.mxu0 0.0
    %653 = vmatmul.mubr.f32.gmra.mrb[0].mxu0 %v541
    %v654 = vpop.f32.mrb[0].mxu0
    %v655 = vadd.f32 0.0, %v654
    %v656 = vpop.f32.mrb[0].mxu0
    %657 = vmatprep.mubr.f32.mxu0 0.0
    %658 = vmatmul.mubr.f32.gmra.mrb[0].mxu0 %v544
    %v659 = vpop.f32.mrb[0].mxu0
    %v660 = vadd.f32 0.0, %v659
    %v661 = vpop.f32.mrb[0].mxu0
    %662 = vmatprep.mubr.f32.mxu0 0.0
    %663 = vmatmul.mubr.f32.gmra.mrb[0].mxu0 %v547
    %v664 = vpop.f32.mrb[0].mxu0
    %v665 = vadd.f32 0.0, %v664
    %v666 = vpop.f32.mrb[0].mxu0
    %667 = vmatprep.mubr.f32.mxu0 0.0
    %668 = vmatmul.mubr.f32.gmra.mrb[0].mxu0 %v550
    %v669 = vpop.f32.mrb[0].mxu0
    %v670 = vadd.f32 0.0, %v669
    %v671 = vpop.f32.mrb[0].mxu0
    %672 = vmatprep.mubr.f32.mxu0 0.0
    %673 = vmatmul.mubr.f32.gmra.mrb[0].mxu0 %v553
    %v674 = vpop.f32.mrb[0].mxu0
    %v675 = vadd.f32 0.0, %v674
    %v676 = vpop.f32.mrb[0].mxu0
    %677 = vmatprep.mubr.f32.mxu0 0.0
    %678 = vmatmul.mubr.f32.gmra.mrb[0].mxu0 %v556
    %v679 = vpop.f32.mrb[0].mxu0
    %v680 = vadd.f32 0.0, %v679
    %v681 = vpop.f32.mrb[0].mxu0
    %682 = vmatprep.mubr.f32.mxu0 0.0
    %683 = vmatmul.mubr.f32.gmra.mrb[0].mxu0 %v559
    %v684 = vpop.f32.mrb[0].mxu0
    %v685 = vadd.f32 0.0, %v684
    %v686 = vpop.f32.mrb[0].mxu0
    %687 = vmatprep.mubr.f32.mxu0 0.0
    %688 = vmatmul.mubr.f32.gmra.mrb[0].mxu0 %v562
    %v689 = vpop.f32.mrb[0].mxu0
    %v690 = vadd.f32 0.0, %v689
    %v691 = vpop.f32.mrb[0].mxu0
    %692 = vmatprep.mubr.f32.mxu0 0.0
    %693 = vmatmul.mubr.f32.gmra.mrb[0].mxu0 %v565
    %v694 = vpop.f32.mrb[0].mxu0
    %v695 = vadd.f32 0.0, %v694
    %v696 = vpop.f32.mrb[0].mxu0
    %697 = vmatprep.mubr.f32.mxu0 0.0
    %698 = vmatmul.mubr.f32.gmra.mrb[0].mxu0 %v568
    %v699 = vpop.f32.mrb[0].mxu0
    %v700 = vadd.f32 0.0, %v699
    %v701 = vpop.f32.mrb[0].mxu0
    %702 = vmatprep.mubr.f32.mxu0 0.0
    %703 = vmatmul.mubr.f32.gmra.mrb[0].mxu0 %v571
    %v704 = vpop.f32.mrb[0].mxu0
    %v705 = vadd.f32 0.0, %v704
    %v706 = vpop.f32.mrb[0].mxu0
    %707 = vmatprep.mubr.f32.mxu0 0.0
    %708 = vmatmul.mubr.f32.gmra.mrb[0].mxu0 %v574
    %v709 = vpop.f32.mrb[0].mxu0
    %v710 = vadd.f32 0.0, %v709
    %v711 = vpop.f32.mrb[0].mxu0
    %712 = vmatprep.mubr.f32.mxu0 0.0
    %713 = vmatmul.mubr.f32.gmra.mrb[0].mxu0 %v577
    %v714 = vpop.f32.mrb[0].mxu0
    %v715 = vadd.f32 0.0, %v714
    %v716 = vpop.f32.mrb[0].mxu0
    %717 = vmatprep.mubr.f32.mxu0 0.0
    %718 = vmatmul.mubr.f32.gmra.mrb[0].mxu0 %v580
    %v719 = vpop.f32.mrb[0].mxu0
    %v720 = vadd.f32 0.0, %v719
    %v721 = vpop.f32.mrb[0].mxu0
    %722 = vmatprep.mubr.f32.mxu0 0.0
    %723 = vmatmul.mubr.f32.gmra.mrb[0].mxu0 %v583
    %v724 = vpop.f32.mrb[0].mxu0
    %v725 = vadd.f32 0.0, %v724
    %v726 = vpop.f32.mrb[0].mxu0
    %727 = vmatprep.mubr.f32.mxu0 0.0
    %728 = vmatmul.mubr.f32.gmra.mrb[0].mxu0 %v586
    %v729 = vpop.f32.mrb[0].mxu0
    %v730 = vadd.f32 0.0, %v729
    %v731 = vpop.f32.mrb[0].mxu0
    %732 = vdwg.mxu0
    %v734 = vsel %vm91, %v476, 0
    %v737 = vsel %vm91, %v477, 0
    %v740 = vsel %vm91, %v478, 0
    %v743 = vsel %vm91, %v479, 0
    %v746 = vsel %vm91, %v480, 0
    %v749 = vsel %vm91, %v481, 0
    %v752 = vsel %vm91, %v482, 0
    %v755 = vsel %vm91, %v483, 0
    %v758 = vsel %vm91, %v484, 0
    %v761 = vsel %vm91, %v485, 0
    %v764 = vsel %vm91, %v486, 0
    %v767 = vsel %vm91, %v487, 0
    %v770 = vsel %vm91, %v488, 0
    %v773 = vsel %vm91, %v489, 0
    %v776 = vsel %vm91, %v490, 0
    %v779 = vsel %vm91, %v491, 0
    %781 = vmatprep.subr.mxu0 0.0
    %782 = vmatpush1.msra.mxu0 %v524
    %783 = vmatprep.subr.mxu0 0.0
    %784 = vmatpush1.msra.mxu0 %v525
    %785 = vmatprep.subr.mxu0 0.0
    %786 = vmatpush1.msra.mxu0 %v526
    %787 = vmatprep.subr.mxu0 0.0
    %788 = vmatpush1.msra.mxu0 %v527
    %789 = vmatprep.subr.mxu0 0.0
    %790 = vmatpush1.msra.mxu0 %v528
    %791 = vmatprep.subr.mxu0 0.0
    %792 = vmatpush1.msra.mxu0 %v529
    %793 = vmatprep.subr.mxu0 0.0
    %794 = vmatpush1.msra.mxu0 %v530
    %795 = vmatprep.subr.mxu0 0.0
    %796 = vmatpush1.msra.mxu0 %v531
    %797 = vmatprep.subr.mxu0 0.0
    %798 = vmatpush1.msra.mxu0 0.0
    %799 = vmatprep.subr.mxu0 0.0
    %800 = vmatpush1.msra.mxu0 0.0
    %801 = vmatprep.subr.mxu0 0.0
    %802 = vmatpush1.msra.mxu0 0.0
    %803 = vmatprep.subr.mxu0 0.0
    %804 = vmatpush1.msra.mxu0 0.0
    %805 = vmatprep.subr.mxu0 0.0
    %806 = vmatpush1.msra.mxu0 0.0
    %807 = vmatprep.subr.mxu0 0.0
    %808 = vmatpush1.msra.mxu0 0.0
    %809 = vmatprep.subr.mxu0 0.0
    %810 = vmatpush1.msra.mxu0 0.0
    %811 = vmatprep.subr.mxu0 0.0
    %812 = vmatpush1.msra.mxu0 0.0
    %813 = vmatprep.subr.mxu0 0.0
    %814 = vmatpush1.msra.mxu0 0.0
    %815 = vmatprep.subr.mxu0 0.0
    %816 = vmatpush1.msra.mxu0 0.0
    %817 = vmatprep.subr.mxu0 0.0
    %818 = vmatpush1.msra.mxu0 0.0
    %819 = vmatprep.subr.mxu0 0.0
    %820 = vmatpush1.msra.mxu0 0.0
    %821 = vmatprep.subr.mxu0 0.0
    %822 = vmatpush1.msra.mxu0 0.0
    %823 = vmatprep.subr.mxu0 0.0
    %824 = vmatpush1.msra.mxu0 0.0
    %825 = vmatprep.subr.mxu0 0.0
    %826 = vmatpush1.msra.mxu0 0.0
    %827 = vmatprep.subr.mxu0 0.0
    %828 = vmatpush1.msra.mxu0 0.0
    %829 = vmatprep.subr.mxu0 0.0
    %830 = vmatpush1.msra.mxu0 0.0
    %831 = vmatprep.subr.mxu0 0.0
    %832 = vmatpush1.msra.mxu0 0.0
    %833 = vmatprep.subr.mxu0 0.0
    %834 = vmatpush1.msra.mxu0 0.0
    %835 = vmatprep.subr.mxu0 0.0
    %836 = vmatpush1.msra.mxu0 0.0
    %837 = vmatprep.subr.mxu0 0.0
    %838 = vmatpush1.msra.mxu0 0.0
    %839 = vmatprep.subr.mxu0 0.0
    %840 = vmatpush1.msra.mxu0 0.0
    %841 = vmatprep.subr.mxu0 0.0
    %842 = vmatpush1.msra.mxu0 0.0
    %843 = vmatprep.subr.mxu0 0.0
    %844 = vmatpush1.msra.mxu0 0.0
    %845 = vmatprep.mubr.f32.mxu0 0.0
    %846 = vmatmul.mubr.f32.gmra.mrb[0].mxu0 %v734
    %v847 = vpop.f32.mrb[0].mxu0
    %v848 = vadd.f32 %v655, %v847
    %v849 = vpop.f32.mrb[0].mxu0
    %850 = vmatprep.mubr.f32.mxu0 0.0
    %851 = vmatmul.mubr.f32.gmra.mrb[0].mxu0 %v737
    %v852 = vpop.f32.mrb[0].mxu0
    %v853 = vadd.f32 %v660, %v852
    %v854 = vpop.f32.mrb[0].mxu0
    %855 = vmatprep.mubr.f32.mxu0 0.0
    %856 = vmatmul.mubr.f32.gmra.mrb[0].mxu0 %v740
    %v857 = vpop.f32.mrb[0].mxu0
    %v858 = vadd.f32 %v665, %v857
    %v859 = vpop.f32.mrb[0].mxu0
    %860 = vmatprep.mubr.f32.mxu0 0.0
    %861 = vmatmul.mubr.f32.gmra.mrb[0].mxu0 %v743
    %v862 = vpop.f32.mrb[0].mxu0
    %v863 = vadd.f32 %v670, %v862
    %v864 = vpop.f32.mrb[0].mxu0
    %865 = vmatprep.mubr.f32.mxu0 0.0
    %866 = vmatmul.mubr.f32.gmra.mrb[0].mxu0 %v746
    %v867 = vpop.f32.mrb[0].mxu0
    %v868 = vadd.f32 %v675, %v867
    %v869 = vpop.f32.mrb[0].mxu0
    %870 = vmatprep.mubr.f32.mxu0 0.0
    %871 = vmatmul.mubr.f32.gmra.mrb[0].mxu0 %v749
    %v872 = vpop.f32.mrb[0].mxu0
    %v873 = vadd.f32 %v680, %v872
    %v874 = vpop.f32.mrb[0].mxu0
    %875 = vmatprep.mubr.f32.mxu0 0.0
    %876 = vmatmul.mubr.f32.gmra.mrb[0].mxu0 %v752
    %v877 = vpop.f32.mrb[0].mxu0
    %v878 = vadd.f32 %v685, %v877
    %v879 = vpop.f32.mrb[0].mxu0
    %880 = vmatprep.mubr.f32.mxu0 0.0
    %881 = vmatmul.mubr.f32.gmra.mrb[0].mxu0 %v755
    %v882 = vpop.f32.mrb[0].mxu0
    %v883 = vadd.f32 %v690, %v882
    %v884 = vpop.f32.mrb[0].mxu0
    %885 = vmatprep.mubr.f32.mxu0 0.0
    %886 = vmatmul.mubr.f32.gmra.mrb[0].mxu0 %v758
    %v887 = vpop.f32.mrb[0].mxu0
    %v888 = vadd.f32 %v695, %v887
    %v889 = vpop.f32.mrb[0].mxu0
    %890 = vmatprep.mubr.f32.mxu0 0.0
    %891 = vmatmul.mubr.f32.gmra.mrb[0].mxu0 %v761
    %v892 = vpop.f32.mrb[0].mxu0
    %v893 = vadd.f32 %v700, %v892
    %v894 = vpop.f32.mrb[0].mxu0
    %895 = vmatprep.mubr.f32.mxu0 0.0
    %896 = vmatmul.mubr.f32.gmra.mrb[0].mxu0 %v764
    %v897 = vpop.f32.mrb[0].mxu0
    %v898 = vadd.f32 %v705, %v897
    %v899 = vpop.f32.mrb[0].mxu0
    %900 = vmatprep.mubr.f32.mxu0 0.0
    %901 = vmatmul.mubr.f32.gmra.mrb[0].mxu0 %v767
    %v902 = vpop.f32.mrb[0].mxu0
    %v903 = vadd.f32 %v710, %v902
    %v904 = vpop.f32.mrb[0].mxu0
    %905 = vmatprep.mubr.f32.mxu0 0.0
    %906 = vmatmul.mubr.f32.gmra.mrb[0].mxu0 %v770
    %v907 = vpop.f32.mrb[0].mxu0
    %v908 = vadd.f32 %v715, %v907
    %v909 = vpop.f32.mrb[0].mxu0
    %910 = vmatprep.mubr.f32.mxu0 0.0
    %911 = vmatmul.mubr.f32.gmra.mrb[0].mxu0 %v773
    %v912 = vpop.f32.mrb[0].mxu0
    %v913 = vadd.f32 %v720, %v912
    %v914 = vpop.f32.mrb[0].mxu0
    %915 = vmatprep.mubr.f32.mxu0 0.0
    %916 = vmatmul.mubr.f32.gmra.mrb[0].mxu0 %v776
    %v917 = vpop.f32.mrb[0].mxu0
    %v918 = vadd.f32 %v725, %v917
    %v919 = vpop.f32.mrb[0].mxu0
    %920 = vmatprep.mubr.f32.mxu0 0.0
    %921 = vmatmul.mubr.f32.gmra.mrb[0].mxu0 %v779
    %v922 = vpop.f32.mrb[0].mxu0
    %v923 = vadd.f32 %v730, %v922
    %v924 = vpop.f32.mrb[0].mxu0
    %925 = vdwg.mxu0
    %v926 = vld [vmem:[%s3] sm:$0x1]
    %v928 = vlaneseq
    %v929 = vshrl.u32 %v928, 7
    %v930 = vsub.s32 0, %v929
    %v931 = vrot.slane %v926, %v930
    %v933 = vadd.f32 %v848, %v931
    %v934 = vadd.f32 %v853, %v931
    %v935 = vadd.f32 %v858, %v931
    %v936 = vadd.f32 %v863, %v931
    %v937 = vadd.f32 %v868, %v931
    %v938 = vadd.f32 %v873, %v931
    %v939 = vadd.f32 %v878, %v931
    %v940 = vadd.f32 %v883, %v931
    %v941 = vadd.f32 %v888, %v931
    %v942 = vadd.f32 %v893, %v931
    %v943 = vadd.f32 %v898, %v931
    %v944 = vadd.f32 %v903, %v931
    %v945 = vadd.f32 %v908, %v931
    %v946 = vadd.f32 %v913, %v931
    %v947 = vadd.f32 %v918, %v931
    %v948 = vadd.f32 %v923, %v931
    %949 = vst.msk [vmem:[%s4] sm:$0xff] %vm91, %v933
    %950 = vst.msk [vmem:[%s4 + $0x8] sm:$0xff] %vm91, %v934
    %951 = vst.msk [vmem:[%s4 + $0x10] sm:$0xff] %vm91, %v935
    %952 = vst.msk [vmem:[%s4 + $0x18] sm:$0xff] %vm91, %v936
    %953 = vst.msk [vmem:[%s4 + $0x20] sm:$0xff] %vm91, %v937
    %954 = vst.msk [vmem:[%s4 + $0x28] sm:$0xff] %vm91, %v938
    %955 = vst.msk [vmem:[%s4 + $0x30] sm:$0xff] %vm91, %v939
    %956 = vst.msk [vmem:[%s4 + $0x38] sm:$0xff] %vm91, %v940
    %957 = vst.msk [vmem:[%s4 + $0x40] sm:$0xff] %vm91, %v941
    %958 = vst.msk [vmem:[%s4 + $0x48] sm:$0xff] %vm91, %v942
    %959 = vst.msk [vmem:[%s4 + $0x50] sm:$0xff] %vm91, %v943
    %960 = vst.msk [vmem:[%s4 + $0x58] sm:$0xff] %vm91, %v944
    %961 = vst.msk [vmem:[%s4 + $0x60] sm:$0xff] %vm91, %v945
    %962 = vst.msk [vmem:[%s4 + $0x68] sm:$0xff] %vm91, %v946
    %963 = vst.msk [vmem:[%s4 + $0x70] sm:$0xff] %vm91, %v947
    %964 = vst.msk [vmem:[%s4 + $0x78] sm:$0xff] %vm91, %v948
    // Predicated region
    $region30: #{tpu_custom_call.1} parent=1 // pred_check
      _
    $region31: #{tpu_custom_call.1} parent=1 // pred_check_branch
      %966 = sbr.rel (0) target = $region33
    $region32: #{tpu_custom_call.1} parent=1 // pred_region
      _
    $region33: #{tpu_custom_call.1} parent=1 // pred_fallthru
      _
    // Predicated region
    $region34: #{tpu_custom_call.1} parent=1 // pred_check
      _
    $region35: #{tpu_custom_call.1} parent=1 // pred_check_branch
      %968 = sbr.rel (0) target = $region37
    $region36: #{tpu_custom_call.1} parent=1 // pred_region
      _
    $region37: #{tpu_custom_call.1} parent=1 // pred_fallthru
      _
    %969 = vsyncpa [#allocation3], 1
    %970 = vsyncpa [#allocation5], 1

</llo_original>
